<compile_context>
chip_gen: v5e
topology: v5e:2x2
jax: 0.10.0
libtpu: 0.0.40
codegen_flags: <defaults>
</compile_context>

<pallas_src>
import jax
import jax.numpy as jnp
from jax.experimental import pallas as pl
from jax.experimental.pallas import tpu as pltpu

EPS = 1e-9       # matches nn.RMSNorm(eps=1e-09)
NEG = -1e30      # additive "-inf" for the in-kernel causal mask
F32 = jnp.float32
BF16 = jnp.bfloat16


# ----------------------------------------------------------------------------- helpers
def _mm_t(a, w):
    """a:(M,K) x w:(N,K) -> (M,N) f32 accumulation, i.e. a @ w.T without transposing w."""
    return jax.lax.dot_general(a, w, (((1,), (1,)), ((), ())),
                               preferred_element_type=F32)


def _rmsnorm(v, w):
    return v * jax.lax.rsqrt(jnp.mean(v * v, axis=-1, keepdims=True) + EPS) * w


def _vmem_limit_bytes():
    # ~5/8 of physical VMEM: leaves headroom for Mosaic internal scratch / multi-buffering.
    try:
        return int(pltpu.get_tpu_info().vmem_capacity_bytes * 5 // 8)
    except Exception:
        return None


def _params(dims):
    return pltpu.CompilerParams(dimension_semantics=dims,
                                vmem_limit_bytes=_vmem_limit_bytes())


def _block_spec(block_shape, index_map, *, single_buffer=False):
    """BlockSpec; constant-index operands get a single buffer (double-buffer is VMEM waste)."""
    if single_buffer:
        try:
            return pl.BlockSpec(block_shape, index_map, pipeline_mode=pl.Buffered(1))
        except Exception:   # older jax without pipeline_mode / Buffered
            pass
    return pl.BlockSpec(block_shape, index_map)


def _tile(n, target, align):
    """Largest tile <= target that divides n and is `align`-aligned (else the full dim)."""
    if n <= target:
        return n
    t = (target // align) * align
    while t >= align:
        if n % t == 0:
            return t
        t -= align
    return n


# -------------------------------------------------------------------- pass 1: QKV proj
def _qkv_proj_kernel(x_ref, rms1_ref, wqkv_ref, qkv_ref):
    h = _rmsnorm(x_ref[...].astype(F32), rms1_ref[...]).astype(BF16)
    qkv_ref[...] = _mm_t(h, wqkv_ref[...]).astype(qkv_ref.dtype)


def _qkv_proj(x, rms1, wqkv, *, ts):
    B, S, D = x.shape
    return pl.pallas_call(
        _qkv_proj_kernel,
        out_shape=jax.ShapeDtypeStruct((B, S, 3 * D), BF16),
        grid_spec=pltpu.PrefetchScalarGridSpec(
            num_scalar_prefetch=0,
            grid=(B, S // ts),
            in_specs=[
                pl.BlockSpec((pl.Squeezed(), ts, D), lambda b, i: (b, i, 0)),
                _block_spec((1, D), lambda b, i: (0, 0), single_buffer=True),
                _block_spec((3 * D, D), lambda b, i: (0, 0), single_buffer=True),
            ],
            out_specs=pl.BlockSpec((pl.Squeezed(), ts, 3 * D), lambda b, i: (b, i, 0)),
        ),
        compiler_params=_params(("parallel", "parallel")),
    )(x, rms1, wqkv)


# --------------------------------------------------------------- pass 2: flash attention
def _make_flash_kernel(*, head_dim, tq, tkv, kt, causal, scale):
    hd = head_dim

    def rope(t, cos, sin_signed):
        # rotate_half via an XLU roll; sign of the rotated half is folded into sin.
        return t * cos + pltpu.roll(t, shift=hd // 2, axis=1) * sin_signed

    def kernel(*refs):
        if causal:
            mask_ref = None
            (q_ref, k_ref, v_ref, cos_q, sin_q, cos_k, sin_k,
             o_ref, q_scr, m_scr, l_scr, acc_scr) = refs
        else:
            (mask_ref, q_ref, k_ref, v_ref, cos_q, sin_q, cos_k, sin_k,
             o_ref, q_scr, m_scr, l_scr, acc_scr) = refs

        qi = pl.program_id(2)
        ki = pl.program_id(3)

        @pl.when(ki == 0)
        def _():
            q = rope(q_ref[...].astype(F32), cos_q[...], sin_q[...]) * scale
            q_scr[...] = q.astype(BF16)
            m_scr[...] = jnp.full_like(m_scr, -jnp.inf)
            l_scr[...] = jnp.zeros_like(l_scr)
            acc_scr[...] = jnp.zeros_like(acc_scr)

        def attend():
            k = rope(k_ref[...].astype(F32), cos_k[...], sin_k[...]).astype(BF16)
            s = _mm_t(q_scr[...], k)                                   # (tq, tkv) f32
            if causal:
                rows = qi * tq + jax.lax.broadcasted_iota(jnp.int32, (tq, tkv), 0)
                cols = ki * tkv + jax.lax.broadcasted_iota(jnp.int32, (tq, tkv), 1)
                s = s + jnp.where(rows >= cols, 0.0, NEG)
            else:
                s = s + mask_ref[...].astype(F32)
            m_prev = m_scr[...]
            m_new = jnp.maximum(m_prev, jnp.max(s, axis=-1, keepdims=True))
            alpha = jnp.exp(m_prev - m_new)
            p = jnp.exp(s - m_new)
            l_scr[...] = alpha * l_scr[...] + jnp.sum(p, axis=-1, keepdims=True)
            acc_scr[...] = alpha * acc_scr[...] + jnp.dot(
                p.astype(BF16), v_ref[...], preferred_element_type=F32)
            m_scr[...] = m_new

        if causal:
            # kv tiles entirely above the diagonal contribute nothing; skip the compute.
            @pl.when(ki * tkv <= qi * tq + (tq - 1))
            def _():
                attend()
        else:
            attend()

        @pl.when(ki == kt - 1)
        def _():
            # exact divide (runs once per (b,h,q-tile); not on the hot slot)
            o_ref[...] = (acc_scr[...] / l_scr[...]).astype(o_ref.dtype)

    return kernel


def _flash_attention(q, k, v, cos, sin, mask, *, tq, tkv, causal):
    B, H, S, hd = q.shape
    qt, kt = S // tq, S // tkv
    scale = 1.0 / (hd ** 0.5)
    kernel = _make_flash_kernel(head_dim=hd, tq=tq, tkv=tkv, kt=kt,
                                causal=causal, scale=scale)

    in_specs, inputs = [], []
    if not causal:
        assert mask is not None and mask.shape == (S, S)
        in_specs.append(pl.BlockSpec((tq, tkv), lambda b, h, qi, ki: (qi, ki)))
        inputs.append(mask.astype(F32))

    in_specs += [
        pl.BlockSpec((pl.Squeezed(), pl.Squeezed(), tq, hd),
                     lambda b, h, qi, ki: (b, h, qi, 0)),              # q tile
        pl.BlockSpec((pl.Squeezed(), pl.Squeezed(), tkv, hd),
                     lambda b, h, qi, ki: (b, h, ki, 0)),              # k tile
        pl.BlockSpec((pl.Squeezed(), pl.Squeezed(), tkv, hd),
                     lambda b, h, qi, ki: (b, h, ki, 0)),              # v tile
        pl.BlockSpec((tq, hd), lambda b, h, qi, ki: (qi, 0)),          # cos (q)
        pl.BlockSpec((tq, hd), lambda b, h, qi, ki: (qi, 0)),          # sin (q)
        pl.BlockSpec((tkv, hd), lambda b, h, qi, ki: (ki, 0)),         # cos (k)
        pl.BlockSpec((tkv, hd), lambda b, h, qi, ki: (ki, 0)),         # sin (k)
    ]
    inputs += [q, k, v, cos, sin, cos, sin]

    return pl.pallas_call(
        kernel,
        out_shape=jax.ShapeDtypeStruct((B, H, S, hd), BF16),
        grid_spec=pltpu.PrefetchScalarGridSpec(
            num_scalar_prefetch=0,
            grid=(B, H, qt, kt),
            in_specs=in_specs,
            out_specs=pl.BlockSpec((pl.Squeezed(), pl.Squeezed(), tq, hd),
                                   lambda b, h, qi, ki: (b, h, qi, 0)),
            scratch_shapes=[
                pltpu.VMEM((tq, hd), BF16),   # RoPE'd, pre-scaled q
                pltpu.VMEM((tq, 1), F32),     # running max
                pltpu.VMEM((tq, 1), F32),     # running sum
                pltpu.VMEM((tq, hd), F32),    # output accumulator
            ]),
        compiler_params=_params(("parallel", "parallel", "parallel", "arbitrary")),
    )(*inputs)


# -------------------------------------------- pass 3: Wo + residual + RMSNorm2 + SwiGLU
def _ffn_kernel(attn_ref, x_ref, rms2_ref, wo_ref, w1_ref, b1_ref, w2_ref, b2_ref,
                w3_ref, b3_ref, o_ref, x1_scr, h2_scr, y_scr):
    j = pl.program_id(2)

    @pl.when(j == 0)
    def _():
        # one wide-K Wo matmul + residual 1, then rmsnorm2 once per row tile
        x1 = _mm_t(attn_ref[...], wo_ref[...]) + x_ref[...].astype(F32)
        x1_scr[...] = x1
        h2_scr[...] = _rmsnorm(x1, rms2_ref[...]).astype(BF16)
        y_scr[...] = x1 + b3_ref[...]

    h2 = h2_scr[...]
    g = _mm_t(h2, w1_ref[...]) + b1_ref[...]
    u = _mm_t(h2, w2_ref[...]) + b2_ref[...]
    ff = (g * jax.nn.sigmoid(g)) * u                                   # SiLU(g) * u
    y_scr[...] += _mm_t(ff.astype(BF16), w3_ref[...])

    @pl.when(j == pl.num_programs(2) - 1)
    def _():
        o_ref[...] = y_scr[...].astype(o_ref.dtype)


def _ffn(attn, x, rms2, wo, w1, b1, w2, b2, w3, b3, *, ts, tf):
    B, S, D = x.shape
    hidden = w1.shape[0]
    return pl.pallas_call(
        _ffn_kernel,
        out_shape=jax.ShapeDtypeStruct((B, S, D), x.dtype),
        grid_spec=pltpu.PrefetchScalarGridSpec(
            num_scalar_prefetch=0,
            grid=(B, S // ts, hidden // tf),
            in_specs=[
                pl.BlockSpec((pl.Squeezed(), ts, D), lambda b, i, j: (b, i, 0)),   # attn
                pl.BlockSpec((pl.Squeezed(), ts, D), lambda b, i, j: (b, i, 0)),   # x
                _block_spec((1, D), lambda b, i, j: (0, 0), single_buffer=True),   # rms2
                _block_spec((D, D), lambda b, i, j: (0, 0), single_buffer=True),   # wo
                pl.BlockSpec((tf, D), lambda b, i, j: (j, 0)),                     # w1 tile
                pl.BlockSpec((1, tf), lambda b, i, j: (0, j)),                     # b1 tile
                pl.BlockSpec((tf, D), lambda b, i, j: (j, 0)),                     # w2 tile
                pl.BlockSpec((1, tf), lambda b, i, j: (0, j)),                     # b2 tile
                pl.BlockSpec((D, tf), lambda b, i, j: (0, j)),                     # w3 tile
                _block_spec((1, D), lambda b, i, j: (0, 0), single_buffer=True),   # b3
            ],
            out_specs=pl.BlockSpec((pl.Squeezed(), ts, D), lambda b, i, j: (b, i, 0)),
            scratch_shapes=[
                pltpu.VMEM((ts, D), F32),    # x1 (post-attention residual)
                pltpu.VMEM((ts, D), BF16),   # rmsnorm2(x1)
                pltpu.VMEM((ts, D), F32),    # FFN output accumulator
            ]),
        compiler_params=_params(("parallel", "parallel", "arbitrary")),
    )(attn, x, rms2, wo, w1, b1, w2, b2, w3, b3)


# --------------------------------------------------------------------------- top level
def llama_decoder_layer(x, mask, params, n_heads, *, tq=None, tkv=None, causal=True):
    """Returns (out, mask), mirroring LLaMADecoderLayer.forward((x, mask))."""
    B, S, D = x.shape
    assert D % n_heads == 0
    hd = D // n_heads
    assert hd % 2 == 0
    hidden = params["w1"].shape[0]

    ts = _tile(S, 256, 8)
    tq = _tile(S, 256, 8) if tq is None else tq
    tkv = (_tile(S, 256, 8) if causal else _tile(S, 256, 128)) if tkv is None else tkv
    tf = _tile(hidden, 512, 128)
    assert S % ts == 0 and S % tq == 0 and S % tkv == 0 and hidden % tf == 0

    # RoPE tables (rotate-half convention); rotated-half sign folded into sin.
    inv_freq = 1.0 / (10000.0 ** (jnp.arange(0, hd, 2, dtype=F32) / hd))
    freqs = jnp.outer(jnp.arange(S, dtype=F32), inv_freq)                  # (S, hd//2)
    cos = jnp.concatenate([jnp.cos(freqs), jnp.cos(freqs)], axis=-1)       # (S, hd)
    sin = jnp.concatenate([-jnp.sin(freqs), jnp.sin(freqs)], axis=-1)      # (S, hd)

    rms1 = params["rms1"].astype(F32).reshape(1, D)
    rms2 = params["rms2"].astype(F32).reshape(1, D)
    wqkv = jnp.concatenate([params["wq"], params["wk"], params["wv"]], axis=0).astype(BF16)
    wo = params["wo"].astype(BF16)
    w1 = params["w1"].astype(BF16)
    w2 = params["w2"].astype(BF16)
    w3 = params["w3"].astype(BF16)
    b1 = params["b1"].astype(F32).reshape(1, hidden)
    b2 = params["b2"].astype(F32).reshape(1, hidden)
    b3 = params["b3"].astype(F32).reshape(1, D)

    # Pass 1: rmsnorm1 + fused QKV projection (K/V computed exactly once).
    qkv = _qkv_proj(x, rms1, wqkv, ts=ts)                                  # (B, S, 3D) bf16
    qkv = qkv.reshape(B, S, 3, n_heads, hd).transpose(2, 0, 3, 1, 4)       # (3, B, H, S, hd)
    q, k, v = qkv[0], qkv[1], qkv[2]

    # Pass 2: per-head flash attention over the cached K/V.
    attn = _flash_attention(q, k, v, cos, sin, mask, tq=tq, tkv=tkv, causal=causal)
    attn = attn.transpose(0, 2, 1, 3).reshape(B, S, D)                     # (B, S, D) bf16

    # Pass 3: Wo projection + residual + rmsnorm2 + hidden-tiled SwiGLU + residual.
    out = _ffn(attn, x, rms2, wo, w1, b1, w2, b2, w3, b3, ts=ts, tf=tf)
    return out, mask


# --------------------------------------------------------------------------- reference
def _reference(x, mask, params, n_heads):
    """Pure-JAX f32 reference, same math as the PyTorch module."""
    B, S, D = x.shape
    hd = D // n_heads
    inv_freq = 1.0 / (10000.0 ** (jnp.arange(0, hd, 2, dtype=jnp.float32) / hd))
    t = jnp.arange(S, dtype=jnp.float32)
    emb = jnp.concatenate([jnp.outer(t, inv_freq)] * 2, axis=-1)
    cos, sin = jnp.cos(emb), jnp.sin(emb)

    def rmsnorm(v, w):
        return v * jax.lax.rsqrt(jnp.mean(v * v, -1, keepdims=True) + EPS) * w

    def rope(t4):  # (B, H, S, hd)
        t1, t2 = t4[..., : hd // 2], t4[..., hd // 2:]
        return t4 * cos + jnp.concatenate([-t2, t1], -1) * sin

    h = rmsnorm(x, params["rms1"])
    q = h @ params["wq"].T
    k = h @ params["wk"].T
    v = h @ params["wv"].T
    q, k, v = (a.reshape(B, S, n_heads, hd).transpose(0, 2, 1, 3) for a in (q, k, v))
    q, k = rope(q), rope(k)
    s = jnp.einsum("bhqd,bhkd->bhqk", q, k) / jnp.sqrt(hd) + mask
    p = jax.nn.softmax(s, axis=-1)
    o = jnp.einsum("bhqk,bhkd->bhqd", p, v).transpose(0, 2, 1, 3).reshape(B, S, D)
    x1 = o @ params["wo"].T + x
    h2 = rmsnorm(x1, params["rms2"])
    g = h2 @ params["w1"].T + params["b1"]
    u = h2 @ params["w2"].T + params["b2"]
    y = (jax.nn.silu(g) * u) @ params["w3"].T + params["b3"]
    return y + x1


if __name__ == "__main__":
    B, S, D, H = 2, 16, 32, 4       # batch, seq_len, emb_size, n_heads
    HIDDEN = D                      # xformers SwiGLU(emb_size): hidden defaults to emb_size
    key = jax.random.PRNGKey(0)
    ks = jax.random.split(key, 12)

    def w(k, shape, s=0.05):
        return (s * jax.random.normal(k, shape)).astype(jnp.float32)

    params = {
        "rms1": jnp.ones((D,), jnp.float32),
        "rms2": jnp.ones((D,), jnp.float32),
        "wq": w(ks[0], (D, D)), "wk": w(ks[1], (D, D)),
        "wv": w(ks[2], (D, D)), "wo": w(ks[3], (D, D)),
        "w1": w(ks[4], (HIDDEN, D)), "b1": w(ks[5], (HIDDEN,)),
        "w2": w(ks[6], (HIDDEN, D)), "b2": w(ks[7], (HIDDEN,)),
        "w3": w(ks[8], (D, HIDDEN)), "b3": w(ks[9], (D,)),
    }
    x = jax.random.normal(ks[10], (B, S, D), jnp.float32)
    causal_mask = jnp.where(jnp.tril(jnp.ones((S, S), jnp.bool_)), 0.0, -1e9).astype(jnp.float32)

    ref = _reference(x, causal_mask, params, H)

    # 1) causal mask generated in-kernel; flash tiling exercised (tq=tkv=8 -> 2x2 kv sweep)
    out1, _ = llama_decoder_layer(x, causal_mask, params, H, tq=8, tkv=8, causal=True)
    out1 = jax.block_until_ready(out1)
    assert jnp.allclose(out1, ref, rtol=5e-2, atol=5e-2), "causal kernel mismatch vs reference"

    # 2) external additive-mask path (mask block lane-dense: tkv == S)
    out2, _ = llama_decoder_layer(x, causal_mask, params, H, tq=8, tkv=S, causal=False)
    out2 = jax.block_until_ready(out2)
    assert jnp.allclose(out2, ref, rtol=5e-2, atol=5e-2), "masked kernel mismatch vs reference"

    print("KERNEL_OK")
</pallas_src>

<mosaic_0001>
module attributes {stable_mosaic.version = 11 : i64} {
  func.func @_qkv_proj_kernel(%arg0: i32, %arg1: i32, %arg2: memref<1x16x32xf32, #tpu.memory_space<vmem>>, %arg3: memref<1x32xf32, #tpu.memory_space<vmem>>, %arg4: memref<96x32xbf16, #tpu.memory_space<vmem>>, %arg5: memref<1x16x96xbf16, #tpu.memory_space<vmem>>) attributes {dimension_semantics = [#tpu.dimension_semantics<parallel>, #tpu.dimension_semantics<parallel>], iteration_bounds = array<i64: 2, 1>, scalar_prefetch = 0 : i64, scratch_operands = 0 : i64, tpu.core_type = #tpu.core_type<tc>, window_params = [{transform_indices = @transform_0, window_bounds = array<i64: 1, 16, 32>}, {pipeline_mode = #tpu.pipeline_mode<synchronous>, transform_indices = @transform_1, window_bounds = array<i64: 1, 32>}, {pipeline_mode = #tpu.pipeline_mode<synchronous>, transform_indices = @transform_2, window_bounds = array<i64: 96, 32>}, {transform_indices = @transform_3, window_bounds = array<i64: 1, 16, 96>}]} {
    %c0 = arith.constant 0 : index
    %c0_0 = arith.constant 0 : index
    %c0_1 = arith.constant 0 : index
    %0 = vector.load %arg2[%c0, %c0_0, %c0_1] : memref<1x16x32xf32, #tpu.memory_space<vmem>>, vector<1x16x32xf32>
    %1 = vector.shape_cast %0 : vector<1x16x32xf32> to vector<16x32xf32>
    %c0_2 = arith.constant 0 : index
    %c0_3 = arith.constant 0 : index
    %2 = vector.load %arg3[%c0_2, %c0_3] : memref<1x32xf32, #tpu.memory_space<vmem>>, vector<1x32xf32>
    %3 = arith.mulf %1, %1 : vector<16x32xf32>
    %cst = arith.constant dense<0.000000e+00> : vector<16xf32>
    %4 = vector.multi_reduction <add>, %3, %cst [1] : vector<16x32xf32> to vector<16xf32>
    %5 = vector.shape_cast %4 : vector<16xf32> to vector<16x1xf32>
    %cst_4 = arith.constant 3.200000e+01 : f32
    %6 = vector.broadcast %cst_4 : f32 to vector<16x1xf32>
    %7 = arith.divf %5, %6 : vector<16x1xf32>
    %cst_5 = arith.constant 9.99999971E-10 : f32
    %8 = vector.broadcast %cst_5 : f32 to vector<16x1xf32>
    %9 = arith.addf %7, %8 : vector<16x1xf32>
    %10 = math.rsqrt %9 : vector<16x1xf32>
    %11 = vector.broadcast %10 : vector<16x1xf32> to vector<16x32xf32>
    %12 = arith.mulf %1, %11 : vector<16x32xf32>
    %13 = vector.broadcast %2 : vector<1x32xf32> to vector<16x32xf32>
    %14 = arith.mulf %12, %13 : vector<16x32xf32>
    %15 = arith.truncf %14 : vector<16x32xf32> to vector<16x32xbf16>
    %c0_6 = arith.constant 0 : index
    %c0_7 = arith.constant 0 : index
    %16 = vector.load %arg4[%c0_6, %c0_7] : memref<96x32xbf16, #tpu.memory_space<vmem>>, vector<96x32xbf16>
    %cst_8 = arith.constant dense<0.000000e+00> : vector<16x96xf32>
    %17 = tpu.matmul %15, %16, %cst_8 {dimension_numbers = #tpu.dot_dimension_numbers<[1], [1], [0], [0], [0, 0, 1, 0], [], []>} : vector<16x32xbf16>, vector<96x32xbf16>, vector<16x96xf32> -> vector<16x96xf32>
    %18 = arith.truncf %17 : vector<16x96xf32> to vector<16x96xbf16>
    %c0_9 = arith.constant 0 : index
    %c0_10 = arith.constant 0 : index
    %c0_11 = arith.constant 0 : index
    %19 = vector.load %arg5[%c0_9, %c0_10, %c0_11] : memref<1x16x96xbf16, #tpu.memory_space<vmem>>, vector<1x16x96xbf16>
    %20 = vector.shape_cast %19 : vector<1x16x96xbf16> to vector<16x96xbf16>
    %21 = vector.shape_cast %18 : vector<16x96xbf16> to vector<1x16x96xbf16>
    tpu.vector_store %arg5[%c0_9, %c0_10, %c0_11], %21 {strides = array<i32>} : memref<1x16x96xbf16, #tpu.memory_space<vmem>>, vector<1x16x96xbf16>,
    return
  }
  func.func @transform_0(%arg0: i32, %arg1: i32) -> (i32, i32, i32) {
    %c0_i32 = arith.constant 0 : i32
    %c0_i32_0 = arith.constant 0 : i32
    return %arg0, %arg1, %c0_i32 : i32, i32, i32
  }
  func.func @transform_1(%arg0: i32, %arg1: i32) -> (i32, i32) {
    %c0_i32 = arith.constant 0 : i32
    %c0_i32_0 = arith.constant 0 : i32
    %c0_i32_1 = arith.constant 0 : i32
    return %c0_i32, %c0_i32_0 : i32, i32
  }
  func.func @transform_2(%arg0: i32, %arg1: i32) -> (i32, i32) {
    %c0_i32 = arith.constant 0 : i32
    %c0_i32_0 = arith.constant 0 : i32
    %c0_i32_1 = arith.constant 0 : i32
    return %c0_i32, %c0_i32_0 : i32, i32
  }
  func.func @transform_3(%arg0: i32, %arg1: i32) -> (i32, i32, i32) {
    %c0_i32 = arith.constant 0 : i32
    %c0_i32_0 = arith.constant 0 : i32
    return %arg0, %arg1, %c0_i32 : i32, i32, i32
  }
}

</mosaic_0001>

<llo_original>
// kernel: tpu_custom_call.1
$region0: #{tpu_custom_call.1}
  #allocation0 [shape = 'u32[]', space=smem, size = 0x4, offset = 0x4, fixed_abs, tag = 'smem constant byte address 0x4 - core index']
  #allocation1 [shape = 'u32[72,128]{1,0:T(1,128)}', space=vmem, size = 0x9000, scoped, tag = 'internal scratch']
  %s0 = inlined_call_operand.vmem [shape: f32[2,16,32], index: 0, kind: input, shape index: {}]
  %s1 = inlined_call_operand.vmem [shape: f32[1,32], index: 1, kind: input, shape index: {}]
  %s2 = inlined_call_operand.vmem [shape: bf16[96,32], index: 2, kind: input, shape index: {}]
  %s3 = inlined_call_operand.hbm [shape: bf16[2,16,96], index: 3, kind: output, shape index: {}]
  %s4 = sld [smem:[#allocation0]]
  $region45: #{tpu_custom_call.1} parent=0
    _
  %s6 = ssub.s32 1, %s4
  %s7 = scalar_select 0, %s6, %s4
  $region1: #{tpu_custom_call.1} parent=0
    #allocation2 [shape = 'u8[8192]{0}', space=vmem, size = 0x2000, scoped, tag = 'output window, operand 0']
    #allocation3 [shape = 's32[2]{0}', space=sflag, size = 0x8, scoped, tag = 'scoped memory for tpu_custom_call.1']
    %8 = vsyncpa [#allocation3], 0
    %s9 = scalar_lea.sflag [#allocation3], 1
    %10 = vsyncpa %s9, 0
    loop: start=0, step=1, limit=4
    $region2: #{tpu_custom_call.1} parent=1 // loop_pre_header
      _
    $region3: #{tpu_custom_call.1} parent=1 // loop_header
      %s12 = sphi 0, %s16
      %p13 = scmp.ge.s32.totalorder %s12, 4
      %s19 = sphi 0, %s31
      %s20 = sphi 0, %s27
      %s21 = sphi 0, %s19
      %s22 = sphi 0, %s20
      %s23 = sphi 0, %s21
      %s24 = sphi 0, %s22
      %s36 = sphi 0, %s38
      %s39 = sphi 0, %s36
      %s40 = sphi 0, %s39
      %s56 = sphi 0, %s40
      %s60 = sphi 0, %s60
      %s62 = sphi 0, %s60
      %s63 = sphi 0, %s62
      %s77 = sphi 0, %s63
      %s81 = sphi 0, %s81
      %s83 = sphi 0, %s81
      %s84 = sphi 0, %s83
      %s98 = sphi 0, %s84
      %s106 = sphi 0, %s108
      %s109 = sphi 0, %s106
      %s110 = sphi 0, %s109
      %s126 = sphi 0, %s110
    $region4: #{tpu_custom_call.1} parent=1 // loop_header_branch
      %15 = sbr.rel (%p13) target = $region8
    $region5: #{tpu_custom_call.1} parent=1 // loop_body
      %s17 = ssub.s32 %s12, 1
      %s18 = ssub.s32 %s12, 2
      %s25 = sadd.s32 1, %s20
      %p26 = scmp.ge.s32.totalorder %s25, 1
      %s27 = scalar_select %p26, 0, %s25
      %s28 = sadd.s32 1, %s19
      %s29 = scalar_select %p26, %s28, %s19
      %p30 = scmp.ge.s32.totalorder %s29, 2
      %s31 = scalar_select %p30, 0, %s29
      %s32 = ssub.s32 %s19, %s31
      %s33 = ssub.s32 %s20, %s27
      %s34 = sor.u32 %s32, %s33
      %p35 = scmp.eq.s32.totalorder %s34, 0
      %s37 = sadd.s32 %s36, 1
      %s38 = scalar_select %p35, %s36, %s37
      %p41 = pneg %p35
      %p42 = scmp.eq.s32.totalorder %s12, 1
      %p43 = por %p41, %p42
      %p44 = scmp.ne.s32.totalorder %s36, %s39
      %p45 = scmp.eq.s32.totalorder %s12, 0
      %p46 = por %p44, %p45
      %p47 = scmp.ne.s32.totalorder %s36, %s39
      %p48 = scmp.eq.s32.totalorder %s17, 1
      %p49 = por %p47, %p48
      %p50 = scmp.ne.s32.totalorder %s39, %s40
      %p51 = scmp.eq.s32.totalorder %s17, 0
      %p52 = por %p50, %p51
      %p53 = scmp.ne.s32.totalorder %s39, %s40
      %p54 = scmp.eq.s32.totalorder %s18, 1
      %p55 = por %p53, %p54
      %p57 = scmp.ne.s32.totalorder %s40, %s56
      %p58 = scmp.eq.s32.totalorder %s18, 0
      %p59 = por %p57, %p58
      %s61 = sadd.s32 %s60, 1
      %p64 = scmp.eq.s32.totalorder %s12, 1
      %p65 = scmp.ne.s32.totalorder %s60, %s62
      %p66 = scmp.eq.s32.totalorder %s12, 0
      %p67 = por %p65, %p66
      %p68 = scmp.ne.s32.totalorder %s60, %s62
      %p69 = scmp.eq.s32.totalorder %s17, 1
      %p70 = por %p68, %p69
      %p71 = scmp.ne.s32.totalorder %s62, %s63
      %p72 = scmp.eq.s32.totalorder %s17, 0
      %p73 = por %p71, %p72
      %p74 = scmp.ne.s32.totalorder %s62, %s63
      %p75 = scmp.eq.s32.totalorder %s18, 1
      %p76 = por %p74, %p75
      %p78 = scmp.ne.s32.totalorder %s63, %s77
      %p79 = scmp.eq.s32.totalorder %s18, 0
      %p80 = por %p78, %p79
      %s82 = sadd.s32 %s81, 1
      %p85 = scmp.eq.s32.totalorder %s12, 1
      %p86 = scmp.ne.s32.totalorder %s81, %s83
      %p87 = scmp.eq.s32.totalorder %s12, 0
      %p88 = por %p86, %p87
      %p89 = scmp.ne.s32.totalorder %s81, %s83
      %p90 = scmp.eq.s32.totalorder %s17, 1
      %p91 = por %p89, %p90
      %p92 = scmp.ne.s32.totalorder %s83, %s84
      %p93 = scmp.eq.s32.totalorder %s17, 0
      %p94 = por %p92, %p93
      %p95 = scmp.ne.s32.totalorder %s83, %s84
      %p96 = scmp.eq.s32.totalorder %s18, 1
      %p97 = por %p95, %p96
      %p99 = scmp.ne.s32.totalorder %s84, %s98
      %p100 = scmp.eq.s32.totalorder %s18, 0
      %p101 = por %p99, %p100
      %s102 = ssub.s32 %s19, %s31
      %s103 = ssub.s32 %s20, %s27
      %s104 = sor.u32 %s102, %s103
      %p105 = scmp.eq.s32.totalorder %s104, 0
      %s107 = sadd.s32 %s106, 1
      %s108 = scalar_select %p105, %s106, %s107
      %p111 = pneg %p105
      %p112 = scmp.eq.s32.totalorder %s12, 1
      %p113 = por %p111, %p112
      %p114 = scmp.ne.s32.totalorder %s106, %s109
      %p115 = scmp.eq.s32.totalorder %s12, 0
      %p116 = por %p114, %p115
      %p117 = scmp.ne.s32.totalorder %s106, %s109
      %p118 = scmp.eq.s32.totalorder %s17, 1
      %p119 = por %p117, %p118
      %p120 = scmp.ne.s32.totalorder %s109, %s110
      %p121 = scmp.eq.s32.totalorder %s17, 0
      %p122 = por %p120, %p121
      %p123 = scmp.ne.s32.totalorder %s109, %s110
      %p124 = scmp.eq.s32.totalorder %s18, 1
      %p125 = por %p123, %p124
      %p127 = scmp.ne.s32.totalorder %s110, %s126
      %p128 = scmp.eq.s32.totalorder %s18, 0
      %p129 = por %p127, %p128
      %p130 = scmp.le.s32.totalorder 1, %s12
      %p131 = scmp.lt.s32.totalorder %s12, 3
      %p132 = pnand %p130, %p131
      %p133 = pneg %p132
      // Predicated region
      $region9: #{tpu_custom_call.1} parent=5 // pred_check
        _
      $region10: #{tpu_custom_call.1} parent=5 // pred_check_branch
        %135 = sbr.rel (%p132) target = $region12
      $region11: #{tpu_custom_call.1} parent=5 // pred_region
        %s136 = ssub.s32 %s12, 1
        // Predicated region
        $region13: #{tpu_custom_call.1} parent=11 // pred_check
          %p137 = pneg %p73
        $region14: #{tpu_custom_call.1} parent=11 // pred_check_branch
          %139 = sbr.rel (%p137) target = $region16
        $region15: #{tpu_custom_call.1} parent=11 // pred_region
          _
        $region16: #{tpu_custom_call.1} parent=11 // pred_fallthru
          _
        // Predicated region
        $region17: #{tpu_custom_call.1} parent=11 // pred_check
          %p140 = pneg %p94
        $region18: #{tpu_custom_call.1} parent=11 // pred_check_branch
          %142 = sbr.rel (%p140) target = $region20
        $region19: #{tpu_custom_call.1} parent=11 // pred_region
          _
        $region20: #{tpu_custom_call.1} parent=11 // pred_fallthru
          _
      $region12: #{tpu_custom_call.1} parent=5 // pred_fallthru
        _
      %p143 = scmp.lt.s32.totalorder %s12, 2
      // Predicated region
      $region21: #{tpu_custom_call.1} parent=5 // pred_check
        %p144 = pneg %p143
      $region22: #{tpu_custom_call.1} parent=5 // pred_check_branch
        %146 = sbr.rel (%p144) target = $region24
      $region23: #{tpu_custom_call.1} parent=5 // pred_region
        // Predicated region
        $region25: #{tpu_custom_call.1} parent=23 // pred_check
          %p147 = pneg %p46
        $region26: #{tpu_custom_call.1} parent=23 // pred_check_branch
          %149 = sbr.rel (%p147) target = $region28
        $region27: #{tpu_custom_call.1} parent=23 // pred_region
          %s150 = smul.u32 2, %s20
          %p151 = scmp.lt.s32.totalorder %s19, 1
          %s152 = scalar_select %p151, %s19, 1
          %p153 = scmp.lt.s32.totalorder %s150, 1
          %s154 = scalar_select %p153, %s150, 1
          %s155 = smul.addr %s152, 2
          %s156 = sadd.s32 %s154, %s155
          %s157 = smul.addr %s156, 8
          %s158 = scalar_lea.vmem %s0, %s157
          %s159 = smul.u32 2, %s20
        $region28: #{tpu_custom_call.1} parent=23 // pred_fallthru
          _
      $region24: #{tpu_custom_call.1} parent=5 // pred_fallthru
        _
      %p160 = scmp.le.s32.totalorder 1, %s12
      %p161 = scmp.lt.s32.totalorder %s12, 3
      %p162 = pnand %p160, %p161
      %p163 = pneg %p162
      // Predicated region
      $region29: #{tpu_custom_call.1} parent=5 // pred_check
        _
      $region30: #{tpu_custom_call.1} parent=5 // pred_check_branch
        %165 = sbr.rel (%p162) target = $region32
      $region31: #{tpu_custom_call.1} parent=5 // pred_region
        %s166 = ssub.s32 %s12, 1
        %s167 = smul.u32 2, %s22
        %p168 = scmp.lt.s32.totalorder %s21, 1
        %s169 = scalar_select %p168, %s21, 1
        %p170 = scmp.lt.s32.totalorder %s167, 1
        %s171 = scalar_select %p170, %s167, 1
        %s172 = smul.addr %s169, 2
        %s173 = sadd.s32 %s171, %s172
        %s174 = smul.addr %s173, 8
        %s175 = scalar_lea.vmem %s0, %s174
        %p176 = pneg %p52
        %p177 = pneg %p49
        %p178 = pneg %p73
        %p179 = pneg %p70
        %p180 = pneg %p94
        %p181 = pneg %p91
        %p182 = pneg %p122
        %p183 = pneg %p119
        %s184 = sand.u32 %s109, 1
        %s185 = scalar_lea.sflag [#allocation3], %s184
        %s186 = sand.u32 %s109, 1
        %s187 = smul.addr %s186, 8
        %s188 = scalar_lea.vmem [#allocation2], %s187
        %s189 = smul.u32 2, %s22
        %p190 = scmp.lt.s32.totalorder %s21, 1
        %s191 = scalar_select %p190, %s21, 1
        %p192 = scmp.lt.s32.totalorder %s189, 1
        %s193 = scalar_select %p192, %s189, 1
        %s194 = smul.addr %s191, 2
        %s195 = sadd.s32 %s193, %s194
        %s196 = smul.addr %s195, 8
        %s197 = scalar_lea.vmem %s0, %s196
        %s198 = smul.u32 2, %s22
        %s199 = smul.u32 2, %s22
        %v201 = vld [vmem:[%s197] sm:$0xff]
        %v202 = vld [vmem:[%s197 + $0x8] sm:$0xff]
        %v203 = vld [vmem:[%s1] sm:$0x1]
        %v204 = vmul.f32 %v201, %v201
        %v205 = vmul.f32 %v202, %v202
        %vm206 = vcmask 261120
        %v207 = vsel %vm206, %v204, 0.0
        %208 = vadd.xlane.f32.xlu0 %v207
        %v209 = vpop.xlane.xlu0 %208
        %v210 = vsel %vm206, %v205, 0.0
        %211 = vadd.xlane.f32.xlu0 %v210
        %v212 = vpop.xlane.xlu0 %211
        %v213 = vrcp.pop 32.0
        %v214 = vmul.f32 32.0, %v213
        %v215 = vsub.f32 1.0, %v214
        %v216 = vmul.f32 %v213, %v215
        %v217 = vadd.f32 %v213, %v216
        %vm218 = vweird.f32 %v213
        %v219 = vsel %vm218, %v213, %v217
        %v220 = vmul.f32 %v209, %v219
        %v221 = vmul.f32 %v212, %v219
        %v222 = vadd.f32 %v220, 1e-09
        %v223 = vadd.f32 %v221, 1e-09
        %v224 = vrsqrt.pop %v222
        %v225 = vmul.f32 %v224, %v222
        %v226 = vmul.f32 %v225, %v224
        %v227 = vmul.f32 0.5, %v226
        %v228 = vsub.f32 1.5, %v227
        %v229 = vmul.f32 %v224, %v228
        %vm230 = vweird.f32 %v222
        %vm231 = vweird.f32 %v224
        %vm232 = vmor %vm230, %vm231
        %v233 = vsel %vm232, %v224, %v229
        %v234 = vrsqrt.pop %v223
        %v235 = vmul.f32 %v234, %v223
        %v236 = vmul.f32 %v235, %v234
        %v237 = vmul.f32 0.5, %v236
        %v238 = vsub.f32 1.5, %v237
        %v239 = vmul.f32 %v234, %v238
        %vm240 = vweird.f32 %v223
        %vm241 = vweird.f32 %v234
        %vm242 = vmor %vm240, %vm241
        %v243 = vsel %vm242, %v234, %v239
        %v244 = vmul.f32 %v201, %v233
        %v245 = vmul.f32 %v202, %v243
        %v247 = vperm.slane %v203, 0
        %v249 = vmul.f32 %v244, %v247
        %v250 = vmul.f32 %v245, %v247
        %v251 = vpack.c.bf16 %v250, %v249
        %v252 = vld [vmem:[%s2] sm:$0xf]
        %v253 = vld [vmem:[%s2 + $0x4] sm:$0xf]
        %v254 = vld [vmem:[%s2 + $0x8] sm:$0xf]
        %v255 = vld [vmem:[%s2 + $0xc] sm:$0xf]
        %v256 = vld [vmem:[%s2 + $0x10] sm:$0xf]
        %v257 = vld [vmem:[%s2 + $0x14] sm:$0xf]
        %v258 = vld [vmem:[%s2 + $0x18] sm:$0xf]
        %v259 = vld [vmem:[%s2 + $0x1c] sm:$0xf]
        %v260 = vld [vmem:[%s2 + $0x20] sm:$0xf]
        %v261 = vld [vmem:[%s2 + $0x24] sm:$0xf]
        %v262 = vld [vmem:[%s2 + $0x28] sm:$0xf]
        %v263 = vld [vmem:[%s2 + $0x2c] sm:$0xf]
        %v276 = vunpack.c.l.b16 %v252
        %v277 = vunpack.c.l.b16 %v253
        %v278 = vunpack.c.l.b16 %v254
        %v279 = vunpack.c.l.b16 %v255
        %v280 = vunpack.c.l.b16 %v256
        %v281 = vunpack.c.l.b16 %v257
        %v282 = vunpack.c.l.b16 %v258
        %v283 = vunpack.c.l.b16 %v259
        %v284 = vunpack.c.l.b16 %v260
        %v285 = vunpack.c.l.b16 %v261
        %v286 = vunpack.c.l.b16 %v262
        %v287 = vunpack.c.l.b16 %v263
        %v288 = vpack.c.b16 %v277, %v276
        %v289 = vpack.c.b16 %v279, %v278
        %v290 = vpack.c.b16 %v281, %v280
        %v291 = vpack.c.b16 %v283, %v282
        %v292 = vpack.c.b16 %v285, %v284
        %v293 = vpack.c.b16 %v287, %v286
        %v295 = vsel %vm206, %v251, 0
        %v298 = vsel %vm206, %v288, 0
        %v301 = vsel %vm206, %v289, 0
        %v304 = vsel %vm206, %v290, 0
        %v307 = vsel %vm206, %v291, 0
        %v310 = vsel %vm206, %v292, 0
        %v313 = vsel %vm206, %v293, 0
        %315 = vmatpush.bf16.xpose.msra.mxu0 0
        %316 = vmatpush.bf16.xpose.msra.mxu0 0
        %317 = vmatpush.bf16.xpose.msra.mxu0 %v313
        %318 = vmatpush.bf16.xpose.msra.mxu0 %v310
        %319 = vmatpush.bf16.xpose.msra.mxu0 %v307
        %320 = vmatpush.bf16.xpose.msra.mxu0 %v304
        %321 = vmatpush.bf16.xpose.msra.mxu0 %v301
        %322 = vmatpush.bf16.xpose.msra.mxu0 %v298
        %323 = vmatmul.bf16.gmra.mxu0 %v295
        %v324 = vpop.f32.mrf.mxu0
        %v325 = vadd.f32 0.0, %v324
        %v326 = vpop.f32.mrf.mxu0
        %v327 = vadd.f32 0.0, %v326
        %328 = vdwg.mxu0
        %v329 = vpack.c.bf16 %v325, %v325
        %v330 = vpack.c.bf16 %v327, %v327
        %vm331 = vcmask 781312
        %332 = vst.msk [vmem:[%s188] sm:$0xf] %vm331, %v329
        %333 = vst.msk [vmem:[%s188 + $0x4] sm:$0xf] %vm331, %v330
        %s334 = sand.u32 %s109, 1
        %s335 = scalar_lea.sflag [#allocation3], %s334
        %s336 = sand.u32 %s109, 1
        %s337 = smul.addr %s336, 8
        %s338 = scalar_lea.vmem [#allocation2], %s337
        // Predicated region
        $region33: #{tpu_custom_call.1} parent=31 // pred_check
          %p339 = pneg %p119
        $region34: #{tpu_custom_call.1} parent=31 // pred_check_branch
          %341 = sbr.rel (%p339) target = $region36
        $region35: #{tpu_custom_call.1} parent=31 // pred_region
          %s342 = smul.u32 2, %s22
          %344 = vsyncadd %s335, 0
          %s345 = smul.addr %s21, 2
          %s346 = sadd.s32 %s342, %s345
          %s347 = smul.addr %s346, 4
          %s348 = scalar_lea.hbm %s3, %s347
          %s349 = sshll.u32 %s338, 4
          %s350 = int_to_ptr.vmem [resolvable:$true] %s349
          %s351 = sshll.u32 %s348, 4
          %s352 = int_to_ptr.hbm [resolvable:$true] %s351
          %357 = dma.vmem_to_hbm [thread:$0]  %s350, 128, %s352, %s335, 64, 64, 4
        $region36: #{tpu_custom_call.1} parent=31 // pred_fallthru
          _
      $region32: #{tpu_custom_call.1} parent=5 // pred_fallthru
        _
      %p358 = scmp.le.s32.totalorder 2, %s12
      // Predicated region
      $region37: #{tpu_custom_call.1} parent=5 // pred_check
        %p359 = pneg %p358
      $region38: #{tpu_custom_call.1} parent=5 // pred_check_branch
        %361 = sbr.rel (%p359) target = $region40
      $region39: #{tpu_custom_call.1} parent=5 // pred_region
        %s362 = ssub.s32 %s12, 2
        // Predicated region
        $region41: #{tpu_custom_call.1} parent=39 // pred_check
          %p363 = pneg %p125
        $region42: #{tpu_custom_call.1} parent=39 // pred_check_branch
          %365 = sbr.rel (%p363) target = $region44
        $region43: #{tpu_custom_call.1} parent=39 // pred_region
          %s366 = sand.u32 %s110, 1
          %s367 = scalar_lea.sflag [#allocation3], %s366
          %s368 = sand.u32 %s110, 1
          %s369 = smul.addr %s368, 8
          %s370 = scalar_lea.vmem [#allocation2], %s369
          %372 = dma.done %s367, 128
        $region44: #{tpu_custom_call.1} parent=39 // pred_fallthru
          _
      $region40: #{tpu_custom_call.1} parent=5 // pred_fallthru
        _
    $region6: #{tpu_custom_call.1} parent=1 // loop_footer
      %s16 = sadd.s32 1, %s12
    $region7: #{tpu_custom_call.1} parent=1 // loop_footer_branch
      %11 = sbr.rel target = $region3
    $region8: #{tpu_custom_call.1} parent=1 // loop_exit
      _
    %373 = vsyncpa [#allocation3], 1
    %s374 = scalar_lea.sflag [#allocation3], 1
    %375 = vsyncpa %s374, 1

</llo_original>
